<compile_context>
chip_gen: v7x
topology: tpu7x:2x2x1
jax: 0.10.0
libtpu: 0.0.40
codegen_flags: <defaults>
</compile_context>

<pallas_src>
import functools

import jax
import jax.numpy as jnp
from jax import lax
from jax.experimental import pallas as pl
from jax.experimental.pallas import tpu as pltpu


_NEG_BIG = -1e30  # finite "-inf" used to mask padded class columns


def _soft_ce_kernel(x_ref, *rest, total_b, total_c, tile_b, tile_c,
                    has_mask, mask_rows, mask_cols, use_mxu):
    if has_mask:
        t_ref, msk_ref, loss_ref, max_sc, sum_sc, sw_sc, swx_sc = rest
    else:
        t_ref, loss_ref, max_sc, sum_sc, sw_sc, swx_sc = rest
        msk_ref = None

    i = pl.program_id(0)      # batch tile   ("parallel")
    j = pl.program_id(1)      # class tile   ("arbitrary", innermost reduction)

    @pl.when(j == 0)
    def _init():
        max_sc[...] = jnp.full_like(max_sc, -jnp.inf)
        sum_sc[...] = jnp.zeros_like(sum_sc)
        sw_sc[...] = jnp.zeros_like(sw_sc)
        swx_sc[...] = jnp.zeros_like(swx_sc)

    x = x_ref[...].astype(jnp.float32)            # (tile_b, tile_c)
    t = t_ref[...].astype(jnp.float32)
    if has_mask:
        w = (1.0 - msk_ref[...].astype(jnp.float32)) * t
    else:
        w = t                                      # pre-fused weights path

    # Partial-tile hygiene: padded rows/columns read undefined VMEM; select them
    # away BEFORE any reduction so Inf/NaN can never reach the accumulators.
    if mask_cols:
        col_ok = (j * tile_c
                  + lax.broadcasted_iota(jnp.int32, (tile_b, tile_c), 1)) < total_c
        x = jnp.where(col_ok, x, _NEG_BIG)
        w = jnp.where(col_ok, w, 0.0)
    if mask_rows:
        row_ok = (i * tile_b
                  + lax.broadcasted_iota(jnp.int32, (tile_b, tile_c), 0)) < total_b
        x = jnp.where(row_ok, x, 0.0)
        w = jnp.where(row_ok, w, 0.0)

    # Online logsumexp over the class axis. Only the row-max uses the XLU; the
    # bulk lane-sums use the idle MXU (ones matvec) so v6e/v7x stay HBM-bound.
    tile_max = jnp.max(x, axis=1, keepdims=True)          # (tile_b, 1)  XLU
    m_new = jnp.maximum(max_sc[...], tile_max)
    alpha = jnp.exp(max_sc[...] - m_new)                  # EUP
    e = jnp.exp(x - m_new)                                # EUP
    wx = w * x                                            # VPU (has slack)
    if use_mxu:
        ones = jnp.ones((tile_c, 1), jnp.float32)
        s_t = jnp.dot(e, ones, preferred_element_type=jnp.float32)
        sw_t = jnp.dot(w, ones, preferred_element_type=jnp.float32)
        swx_t = jnp.dot(wx, ones, preferred_element_type=jnp.float32)
    else:  # tiny class tiles: plain reductions are cheaper than MXU setup
        s_t = jnp.sum(e, axis=1, keepdims=True)
        sw_t = jnp.sum(w, axis=1, keepdims=True)
        swx_t = jnp.sum(wx, axis=1, keepdims=True)

    sum_sc[...] = alpha * sum_sc[...] + s_t
    max_sc[...] = m_new
    sw_sc[...] = sw_sc[...] + sw_t
    swx_sc[...] = swx_sc[...] + swx_t

    @pl.when(j == pl.num_programs(1) - 1)
    def _finish():
        # per-row loss = logsumexp(x) * sum(w) - sum(w * x)
        lse = max_sc[...] + jnp.log(sum_sc[...])
        loss = lse * sw_sc[...] - swx_sc[...]
        if mask_rows:  # belt-and-suspenders: padded rows already contribute 0
            rid = i * tile_b + lax.broadcasted_iota(jnp.int32, (tile_b, 1), 0)
            loss = jnp.where(rid < total_b, loss, 0.0)
        loss_ref[...] = loss


def _round_up(x, m):
    return ((x + m - 1) // m) * m


def _round_down(x, m):
    return (x // m) * m


def _vmem_capacity_bytes():
    try:
        return int(pltpu.get_tpu_info().vmem_capacity_bytes)
    except Exception:
        return 64 * 1024 * 1024   # conservative: v7x per-TensorCore VMEM


def soft_cross_entropy(inputs, target, mask, *, reduction="mean",
                       tile_b=None, tile_c=None):
    """Pallas TPU SoftCrossEntropy.forward for (B, C) logits.

    inputs: (B, C) logits, any float dtype (bf16 recommended to halve HBM bytes).
    target: (B, C) soft targets (any float dtype), OR — if mask is None — the
            pre-fused weights (1 - mask) * target (drops one HBM stream).
    mask:   (B, C), 1 = exclude class from the loss; float/int8/bool, or None.
    """
    assert inputs.ndim == 2, "expected (B, C) logits"
    assert target.shape == inputs.shape
    if reduction not in ("mean", "sum"):
        raise NotImplementedError("Unsupported reduction mode.")
    has_mask = mask is not None
    if has_mask:
        assert mask.shape == inputs.shape

    B, C = inputs.shape
    in_bpe = jnp.dtype(inputs.dtype).itemsize + jnp.dtype(target.dtype).itemsize
    if has_mask:
        in_bpe += jnp.dtype(mask.dtype).itemsize

    cap = _vmem_capacity_bytes()
    budget = int(cap * 0.45)
    # Per (row, col) element: 2x double-buffered raw inputs + ~5 live f32
    # intermediates (x, e, w, w*x, selects). Per row: 128-lane-padded output
    # block (x2 pipeline buffers) + 4 f32 scratch accumulators.
    per_elem = 2 * in_bpe + 5 * 4
    per_row_fixed = (2 + 4) * 128 * 4

    if tile_b is None or tile_c is None:
        full_row = C * per_elem + per_row_fixed
        tb_full = budget // full_row
        if tb_full >= min(256, _round_up(B, 8)):
            # Full class rows fit with a healthy batch tile: single class tile.
            auto_tb = min(_round_down(tb_full, 8), 1024, _round_up(B, 8))
            auto_tc = C
        else:
            # Large C (e.g. LLM vocab): tile the class axis in 128-lane chunks
            # and keep the batch tile big enough for multi-MiB DMAs.
            auto_tb = min(256, _round_up(B, 8))
            auto_tc = budget // (auto_tb * per_elem)
            auto_tc = max(128, _round_down(auto_tc, 128))
            auto_tc = min(auto_tc, _round_up(C, 128))
            if auto_tc >= C:
                auto_tc = C
        if tile_b is None:
            tile_b = auto_tb
        if tile_c is None:
            tile_c = auto_tc

    tile_b, tile_c = int(tile_b), int(tile_c)
    if tile_c >= C:
        tile_c = C
    elif tile_c % 128 != 0:
        raise ValueError("tile_c must be a multiple of 128 when tiling the class axis")
    # Keep >= 2 batch tiles whenever possible so v7x's two TensorCores both
    # get work (negligible extra grid-step cost on single-TC v5e/v6e).
    if B >= 16:
        tile_b = min(tile_b, _round_up(pl.cdiv(B, 2), 8))
    tile_b = max(8, _round_down(tile_b, 8))
    tile_b = min(tile_b, _round_up(B, 8))

    num_b = pl.cdiv(B, tile_b)
    num_c = pl.cdiv(C, tile_c)
    padded_b = num_b * tile_b
    mask_rows = (B % tile_b) != 0
    mask_cols = (C % tile_c) != 0
    use_mxu = tile_c >= 256

    est = tile_b * (tile_c * per_elem + per_row_fixed)
    if use_mxu:
        est += tile_c * 128 * 4          # lane-padded ones vector for MXU sums
    vmem_limit = int(min(cap - 2 * 1024 * 1024,
                         max(32 * 1024 * 1024, est + 16 * 1024 * 1024)))

    kernel = functools.partial(
        _soft_ce_kernel, total_b=B, total_c=C, tile_b=tile_b, tile_c=tile_c,
        has_mask=has_mask, mask_rows=mask_rows, mask_cols=mask_cols,
        use_mxu=use_mxu)

    block = pl.BlockSpec((tile_b, tile_c), lambda i, j: (i, j))
    in_specs = [block, block] + ([block] if has_mask else [])
    args = (inputs, target, mask) if has_mask else (inputs, target)

    per_row = pl.pallas_call(
        kernel,
        out_shape=jax.ShapeDtypeStruct((padded_b, 1), jnp.float32),
        grid_spec=pltpu.PrefetchScalarGridSpec(
            num_scalar_prefetch=0,
            grid=(num_b, num_c),
            in_specs=in_specs,
            out_specs=pl.BlockSpec((tile_b, 1), lambda i, j: (i, 0)),
            scratch_shapes=[pltpu.VMEM((tile_b, 1), jnp.float32)
                            for _ in range(4)],
        ),
        compiler_params=pltpu.CompilerParams(
            dimension_semantics=("parallel", "arbitrary"),
            vmem_limit_bytes=vmem_limit,
        ),
    )(*args)

    total = jnp.sum(per_row)                 # padded rows contribute exactly 0
    if reduction == "mean":
        return total / jnp.float32(B)
    return total


def _reference(inputs, target, mask, reduction="mean"):
    x = inputs.astype(jnp.float32)
    t = target.astype(jnp.float32)
    m = mask.astype(jnp.float32)
    ll = jax.nn.log_softmax(x, axis=1)
    batch_loss = -jnp.sum((1.0 - m) * t * ll, axis=1)
    return jnp.mean(batch_loss) if reduction == "mean" else jnp.sum(batch_loss)


if __name__ == "__main__":
    key = jax.random.PRNGKey(0)
    k1, k2, k3 = jax.random.split(key, 3)

    # 1) basic f32 case: class axis = 128 lanes, batch split into 2 tiles.
    B, C = 16, 128
    x = jax.random.normal(k1, (B, C), dtype=jnp.float32)
    raw_t = jax.random.uniform(k2, (B, C), dtype=jnp.float32)
    t = raw_t / jnp.sum(raw_t, axis=1, keepdims=True)
    m = (jax.random.uniform(k3, (B, C)) < 0.3).astype(jnp.float32)
    out = jax.block_until_ready(soft_cross_entropy(x, t, m, reduction="mean"))
    ref = _reference(x, t, m, "mean")
    assert jnp.allclose(out, ref, rtol=1e-5, atol=1e-5), (out, ref)

    # 2) 'sum' reduction + ragged batch + forced class tiling (online logsumexp,
    #    partial last tiles on both axes).
    B2, C2 = 13, 192
    x2 = jax.random.normal(k1, (B2, C2), dtype=jnp.float32)
    t2 = jax.random.uniform(k2, (B2, C2), dtype=jnp.float32)
    t2 = t2 / jnp.sum(t2, axis=1, keepdims=True)
    m2 = (jax.random.uniform(k3, (B2, C2)) < 0.3).astype(jnp.float32)
    out2 = jax.block_until_ready(
        soft_cross_entropy(x2, t2, m2, reduction="sum", tile_b=8, tile_c=128))
    ref2 = _reference(x2, t2, m2, "sum")
    assert jnp.allclose(out2, ref2, rtol=1e-5, atol=1e-5), (out2, ref2)

    # 3) low-HBM-traffic contract: bf16 logits/targets + int8 mask; wide class
    #    tile exercises the MXU lane-sum path (looser tol for MXU f32 precision).
    B3, C3 = 64, 512
    x3 = jax.random.normal(k1, (B3, C3), dtype=jnp.bfloat16)
    t3 = jax.random.uniform(k2, (B3, C3), dtype=jnp.float32)
    t3 = (t3 / jnp.sum(t3, axis=1, keepdims=True)).astype(jnp.bfloat16)
    m3 = (jax.random.uniform(k3, (B3, C3)) < 0.3).astype(jnp.int8)
    out3 = jax.block_until_ready(soft_cross_entropy(x3, t3, m3, reduction="mean"))
    ref3 = _reference(x3, t3, m3, "mean")
    assert jnp.allclose(out3, ref3, rtol=5e-3, atol=5e-3), (out3, ref3)

    # 4) pre-fused weights path: one fewer HBM stream, same result.
    w = (1.0 - m) * t
    out4 = jax.block_until_ready(soft_cross_entropy(x, w, None, reduction="mean"))
    assert jnp.allclose(out4, ref, rtol=1e-5, atol=1e-5), (out4, ref)

    print("KERNEL_OK")
</pallas_src>

<mosaic_0001>
module attributes {stable_mosaic.version = 11 : i64} {
  func.func @_soft_ce_kernel(%arg0: i32, %arg1: i32, %arg2: memref<8x128xf32, #tpu.memory_space<vmem>>, %arg3: memref<8x128xf32, #tpu.memory_space<vmem>>, %arg4: memref<8x128xf32, #tpu.memory_space<vmem>>, %arg5: memref<8x1xf32, #tpu.memory_space<vmem>>, %arg6: memref<8x1xf32, #tpu.memory_space<vmem>>, %arg7: memref<8x1xf32, #tpu.memory_space<vmem>>, %arg8: memref<8x1xf32, #tpu.memory_space<vmem>>, %arg9: memref<8x1xf32, #tpu.memory_space<vmem>>) attributes {dimension_semantics = [#tpu.dimension_semantics<parallel>, #tpu.dimension_semantics<arbitrary>], iteration_bounds = array<i64: 2, 1>, scalar_prefetch = 0 : i64, scratch_operands = 4 : i64, tpu.core_type = #tpu.core_type<tc>, window_params = [{transform_indices = @transform_0, window_bounds = array<i64: 8, 128>}, {transform_indices = @transform_1, window_bounds = array<i64: 8, 128>}, {transform_indices = @transform_2, window_bounds = array<i64: 8, 128>}, {transform_indices = @transform_3, window_bounds = array<i64: 8, 1>}]} {
    %c0_i32 = arith.constant 0 : i32
    %0 = arith.cmpi eq, %arg1, %c0_i32 : i32
    %1 = arith.extui %0 : i1 to i32
    %c0_i32_0 = arith.constant 0 : i32
    %2 = arith.cmpi ne, %1, %c0_i32_0 : i32
    scf.if %2 {
      %cst_30 = arith.constant 0xFF800000 : f32
      %40 = vector.broadcast %cst_30 : f32 to vector<8x1xf32>
      %c0_31 = arith.constant 0 : index
      %c0_32 = arith.constant 0 : index
      %41 = vector.load %arg6[%c0_31, %c0_32] : memref<8x1xf32, #tpu.memory_space<vmem>>, vector<8x1xf32>
      tpu.vector_store %arg6[%c0_31, %c0_32], %40 {strides = array<i32>} : memref<8x1xf32, #tpu.memory_space<vmem>>, vector<8x1xf32>,
      %cst_33 = arith.constant 0.000000e+00 : f32
      %42 = vector.broadcast %cst_33 : f32 to vector<8x1xf32>
      %c0_34 = arith.constant 0 : index
      %c0_35 = arith.constant 0 : index
      %43 = vector.load %arg7[%c0_34, %c0_35] : memref<8x1xf32, #tpu.memory_space<vmem>>, vector<8x1xf32>
      tpu.vector_store %arg7[%c0_34, %c0_35], %42 {strides = array<i32>} : memref<8x1xf32, #tpu.memory_space<vmem>>, vector<8x1xf32>,
      %cst_36 = arith.constant 0.000000e+00 : f32
      %44 = vector.broadcast %cst_36 : f32 to vector<8x1xf32>
      %c0_37 = arith.constant 0 : index
      %c0_38 = arith.constant 0 : index
      %45 = vector.load %arg8[%c0_37, %c0_38] : memref<8x1xf32, #tpu.memory_space<vmem>>, vector<8x1xf32>
      tpu.vector_store %arg8[%c0_37, %c0_38], %44 {strides = array<i32>} : memref<8x1xf32, #tpu.memory_space<vmem>>, vector<8x1xf32>,
      %cst_39 = arith.constant 0.000000e+00 : f32
      %46 = vector.broadcast %cst_39 : f32 to vector<8x1xf32>
      %c0_40 = arith.constant 0 : index
      %c0_41 = arith.constant 0 : index
      %47 = vector.load %arg9[%c0_40, %c0_41] : memref<8x1xf32, #tpu.memory_space<vmem>>, vector<8x1xf32>
      tpu.vector_store %arg9[%c0_40, %c0_41], %46 {strides = array<i32>} : memref<8x1xf32, #tpu.memory_space<vmem>>, vector<8x1xf32>,
    } else {
    }
    %c0 = arith.constant 0 : index
    %c0_1 = arith.constant 0 : index
    %3 = vector.load %arg2[%c0, %c0_1] : memref<8x128xf32, #tpu.memory_space<vmem>>, vector<8x128xf32>
    %c0_2 = arith.constant 0 : index
    %c0_3 = arith.constant 0 : index
    %4 = vector.load %arg3[%c0_2, %c0_3] : memref<8x128xf32, #tpu.memory_space<vmem>>, vector<8x128xf32>
    %c0_4 = arith.constant 0 : index
    %c0_5 = arith.constant 0 : index
    %5 = vector.load %arg4[%c0_4, %c0_5] : memref<8x128xf32, #tpu.memory_space<vmem>>, vector<8x128xf32>
    %cst = arith.constant 1.000000e+00 : f32
    %6 = vector.broadcast %cst : f32 to vector<8x128xf32>
    %7 = arith.subf %6, %5 : vector<8x128xf32>
    %8 = arith.mulf %7, %4 : vector<8x128xf32>
    %cst_6 = arith.constant dense<0xFF800000> : vector<8xf32>
    %9 = vector.multi_reduction <maximumf>, %3, %cst_6 [1] : vector<8x128xf32> to vector<8xf32>
    %10 = vector.shape_cast %9 : vector<8xf32> to vector<8x1xf32>
    %c0_7 = arith.constant 0 : index
    %c0_8 = arith.constant 0 : index
    %11 = vector.load %arg6[%c0_7, %c0_8] : memref<8x1xf32, #tpu.memory_space<vmem>>, vector<8x1xf32>
    %12 = arith.maximumf %11, %10 : vector<8x1xf32>
    %c0_9 = arith.constant 0 : index
    %c0_10 = arith.constant 0 : index
    %13 = vector.load %arg6[%c0_9, %c0_10] : memref<8x1xf32, #tpu.memory_space<vmem>>, vector<8x1xf32>
    %14 = arith.subf %13, %12 : vector<8x1xf32>
    %15 = math.exp %14 : vector<8x1xf32>
    %16 = vector.broadcast %12 : vector<8x1xf32> to vector<8x128xf32>
    %17 = arith.subf %3, %16 : vector<8x128xf32>
    %18 = math.exp %17 : vector<8x128xf32>
    %19 = arith.mulf %8, %3 : vector<8x128xf32>
    %cst_11 = arith.constant dense<0.000000e+00> : vector<8xf32>
    %20 = vector.multi_reduction <add>, %18, %cst_11 [1] : vector<8x128xf32> to vector<8xf32>
    %21 = vector.shape_cast %20 : vector<8xf32> to vector<8x1xf32>
    %cst_12 = arith.constant dense<0.000000e+00> : vector<8xf32>
    %22 = vector.multi_reduction <add>, %8, %cst_12 [1] : vector<8x128xf32> to vector<8xf32>
    %23 = vector.shape_cast %22 : vector<8xf32> to vector<8x1xf32>
    %cst_13 = arith.constant dense<0.000000e+00> : vector<8xf32>
    %24 = vector.multi_reduction <add>, %19, %cst_13 [1] : vector<8x128xf32> to vector<8xf32>
    %25 = vector.shape_cast %24 : vector<8xf32> to vector<8x1xf32>
    %c0_14 = arith.constant 0 : index
    %c0_15 = arith.constant 0 : index
    %26 = vector.load %arg7[%c0_14, %c0_15] : memref<8x1xf32, #tpu.memory_space<vmem>>, vector<8x1xf32>
    %27 = arith.mulf %15, %26 : vector<8x1xf32>
    %28 = arith.addf %27, %21 : vector<8x1xf32>
    %c0_16 = arith.constant 0 : index
    %c0_17 = arith.constant 0 : index
    %29 = vector.load %arg7[%c0_16, %c0_17] : memref<8x1xf32, #tpu.memory_space<vmem>>, vector<8x1xf32>
    tpu.vector_store %arg7[%c0_16, %c0_17], %28 {strides = array<i32>} : memref<8x1xf32, #tpu.memory_space<vmem>>, vector<8x1xf32>,
    %c0_18 = arith.constant 0 : index
    %c0_19 = arith.constant 0 : index
    %30 = vector.load %arg6[%c0_18, %c0_19] : memref<8x1xf32, #tpu.memory_space<vmem>>, vector<8x1xf32>
    tpu.vector_store %arg6[%c0_18, %c0_19], %12 {strides = array<i32>} : memref<8x1xf32, #tpu.memory_space<vmem>>, vector<8x1xf32>,
    %c0_20 = arith.constant 0 : index
    %c0_21 = arith.constant 0 : index
    %31 = vector.load %arg8[%c0_20, %c0_21] : memref<8x1xf32, #tpu.memory_space<vmem>>, vector<8x1xf32>
    %32 = arith.addf %31, %23 : vector<8x1xf32>
    %c0_22 = arith.constant 0 : index
    %c0_23 = arith.constant 0 : index
    %33 = vector.load %arg8[%c0_22, %c0_23] : memref<8x1xf32, #tpu.memory_space<vmem>>, vector<8x1xf32>
    tpu.vector_store %arg8[%c0_22, %c0_23], %32 {strides = array<i32>} : memref<8x1xf32, #tpu.memory_space<vmem>>, vector<8x1xf32>,
    %c0_24 = arith.constant 0 : index
    %c0_25 = arith.constant 0 : index
    %34 = vector.load %arg9[%c0_24, %c0_25] : memref<8x1xf32, #tpu.memory_space<vmem>>, vector<8x1xf32>
    %35 = arith.addf %34, %25 : vector<8x1xf32>
    %c0_26 = arith.constant 0 : index
    %c0_27 = arith.constant 0 : index
    %36 = vector.load %arg9[%c0_26, %c0_27] : memref<8x1xf32, #tpu.memory_space<vmem>>, vector<8x1xf32>
    tpu.vector_store %arg9[%c0_26, %c0_27], %35 {strides = array<i32>} : memref<8x1xf32, #tpu.memory_space<vmem>>, vector<8x1xf32>,
    %c0_i32_28 = arith.constant 0 : i32
    %37 = arith.cmpi eq, %arg1, %c0_i32_28 : i32
    %38 = arith.extui %37 : i1 to i32
    %c0_i32_29 = arith.constant 0 : i32
    %39 = arith.cmpi ne, %38, %c0_i32_29 : i32
    scf.if %39 {
      %c0_30 = arith.constant 0 : index
      %c0_31 = arith.constant 0 : index
      %40 = vector.load %arg6[%c0_30, %c0_31] : memref<8x1xf32, #tpu.memory_space<vmem>>, vector<8x1xf32>
      %c0_32 = arith.constant 0 : index
      %c0_33 = arith.constant 0 : index
      %41 = vector.load %arg7[%c0_32, %c0_33] : memref<8x1xf32, #tpu.memory_space<vmem>>, vector<8x1xf32>
      %42 = math.log %41 : vector<8x1xf32>
      %43 = arith.addf %40, %42 : vector<8x1xf32>
      %c0_34 = arith.constant 0 : index
      %c0_35 = arith.constant 0 : index
      %44 = vector.load %arg8[%c0_34, %c0_35] : memref<8x1xf32, #tpu.memory_space<vmem>>, vector<8x1xf32>
      %45 = arith.mulf %43, %44 : vector<8x1xf32>
      %c0_36 = arith.constant 0 : index
      %c0_37 = arith.constant 0 : index
      %46 = vector.load %arg9[%c0_36, %c0_37] : memref<8x1xf32, #tpu.memory_space<vmem>>, vector<8x1xf32>
      %47 = arith.subf %45, %46 : vector<8x1xf32>
      %c0_38 = arith.constant 0 : index
      %c0_39 = arith.constant 0 : index
      %48 = vector.load %arg5[%c0_38, %c0_39] : memref<8x1xf32, #tpu.memory_space<vmem>>, vector<8x1xf32>
      tpu.vector_store %arg5[%c0_38, %c0_39], %47 {strides = array<i32>} : memref<8x1xf32, #tpu.memory_space<vmem>>, vector<8x1xf32>,
    } else {
    }
    return
  }
  func.func @transform_0(%arg0: i32, %arg1: i32) -> (i32, i32) {
    %c0_i32 = arith.constant 0 : i32
    return %arg0, %arg1 : i32, i32
  }
  func.func @transform_1(%arg0: i32, %arg1: i32) -> (i32, i32) {
    %c0_i32 = arith.constant 0 : i32
    return %arg0, %arg1 : i32, i32
  }
  func.func @transform_2(%arg0: i32, %arg1: i32) -> (i32, i32) {
    %c0_i32 = arith.constant 0 : i32
    return %arg0, %arg1 : i32, i32
  }
  func.func @transform_3(%arg0: i32, %arg1: i32) -> (i32, i32) {
    %c0_i32 = arith.constant 0 : i32
    %c0_i32_0 = arith.constant 0 : i32
    return %arg0, %c0_i32 : i32, i32
  }
}

</mosaic_0001>

<llo_original>
// kernel: tpu_custom_call.1
$region0: #{tpu_custom_call.1}
  #allocation0 [shape = 'u32[]', space=smem, size = 0x4, offset = 0x4, fixed_abs, tag = 'smem constant byte address 0x4 - core index']
  #allocation1 [shape = 'u32[144,128]{1,0:T(1,128)}', space=vmem, size = 0x12000, scoped, tag = 'internal scratch']
  #allocation2 [shape = 'f32[8,1]{1,0:T(8,128)}', space=vmem, size = 0x1000, scoped, tag = 'scratch operand']
  #allocation3 [shape = 'f32[8,1]{1,0:T(8,128)}', space=vmem, size = 0x1000, scoped, tag = 'scratch operand']
  #allocation4 [shape = 'f32[8,1]{1,0:T(8,128)}', space=vmem, size = 0x1000, scoped, tag = 'scratch operand']
  #allocation5 [shape = 'f32[8,1]{1,0:T(8,128)}', space=vmem, size = 0x1000, scoped, tag = 'scratch operand']
  %s0 = inlined_call_operand.hbm [shape: f32[16,128], index: 0, kind: input, shape index: {}]
  %s1 = inlined_call_operand.hbm [shape: f32[16,128], index: 1, kind: input, shape index: {}]
  %s2 = inlined_call_operand.hbm [shape: f32[16,128], index: 2, kind: input, shape index: {}]
  %s3 = inlined_call_operand.vmem [shape: f32[16,1], index: 3, kind: output, shape index: {}]
  %s4 = sld [smem:[#allocation0]]
  $region65: #{tpu_custom_call.1} parent=0
    _
  %s6 = ssub.s32 1, %s4
  %s7 = scalar_select 0, %s6, %s4
  $region1: #{tpu_custom_call.1} parent=0
    #allocation6 [shape = 'u8[8192]{0}', space=vmem, size = 0x2000, scoped, tag = 'input window, operand 0']
    #allocation7 [shape = 's32[2]{0}', space=sflag, size = 0x8, scoped, tag = 'scoped memory for tpu_custom_call.1']
    #allocation8 [shape = 'u8[8192]{0}', space=vmem, size = 0x2000, scoped, tag = 'input window, operand 1']
    #allocation9 [shape = 's32[2]{0}', space=sflag, size = 0x8, scoped, tag = 'scoped memory for tpu_custom_call.1']
    #allocation10 [shape = 'u8[8192]{0}', space=vmem, size = 0x2000, scoped, tag = 'input window, operand 2']
    %8 = vsyncpa [#allocation7], 0
    %s9 = scalar_lea.sflag [#allocation7], 1
    %10 = vsyncpa %s9, 0
    %11 = vsyncpa [#allocation9], 0
    %s12 = scalar_lea.sflag [#allocation9], 1
    %13 = vsyncpa %s12, 0
    loop: start=0, step=1, limit=4
    $region2: #{tpu_custom_call.1} parent=1 // loop_pre_header
      _
    $region3: #{tpu_custom_call.1} parent=1 // loop_header
      %s15 = sphi 0, %s19
      %p16 = scmp.ge.s32.totalorder %s15, 4
      %s22 = sphi 0, %s34
      %s23 = sphi 0, %s30
      %s24 = sphi 0, %s22
      %s25 = sphi 0, %s23
      %s26 = sphi 0, %s24
      %s27 = sphi 0, %s25
      %s39 = sphi 0, %s41
      %s42 = sphi 0, %s39
      %s43 = sphi 0, %s42
      %s59 = sphi 0, %s43
      %s67 = sphi 0, %s69
      %s70 = sphi 0, %s67
      %s71 = sphi 0, %s70
      %s87 = sphi 0, %s71
      %s95 = sphi 0, %s97
      %s98 = sphi 0, %s95
      %s99 = sphi 0, %s98
      %s115 = sphi 0, %s99
      %s121 = sphi 0, %s123
      %s124 = sphi 0, %s121
      %s125 = sphi 0, %s124
      %s141 = sphi 0, %s125
    $region4: #{tpu_custom_call.1} parent=1 // loop_header_branch
      %18 = sbr.rel (%p16) target = $region8
    $region5: #{tpu_custom_call.1} parent=1 // loop_body
      %s20 = ssub.s32 %s15, 1
      %s21 = ssub.s32 %s15, 2
      %s28 = sadd.s32 1, %s23
      %p29 = scmp.ge.s32.totalorder %s28, 1
      %s30 = scalar_select %p29, 0, %s28
      %s31 = sadd.s32 1, %s22
      %s32 = scalar_select %p29, %s31, %s22
      %p33 = scmp.ge.s32.totalorder %s32, 2
      %s34 = scalar_select %p33, 0, %s32
      %s35 = ssub.s32 %s22, %s34
      %s36 = ssub.s32 %s23, %s30
      %s37 = sor.u32 %s35, %s36
      %p38 = scmp.eq.s32.totalorder %s37, 0
      %s40 = sadd.s32 %s39, 1
      %s41 = scalar_select %p38, %s39, %s40
      %p44 = pneg %p38
      %p45 = scmp.eq.s32.totalorder %s15, 1
      %p46 = por %p44, %p45
      %p47 = scmp.ne.s32.totalorder %s39, %s42
      %p48 = scmp.eq.s32.totalorder %s15, 0
      %p49 = por %p47, %p48
      %p50 = scmp.ne.s32.totalorder %s39, %s42
      %p51 = scmp.eq.s32.totalorder %s20, 1
      %p52 = por %p50, %p51
      %p53 = scmp.ne.s32.totalorder %s42, %s43
      %p54 = scmp.eq.s32.totalorder %s20, 0
      %p55 = por %p53, %p54
      %p56 = scmp.ne.s32.totalorder %s42, %s43
      %p57 = scmp.eq.s32.totalorder %s21, 1
      %p58 = por %p56, %p57
      %p60 = scmp.ne.s32.totalorder %s43, %s59
      %p61 = scmp.eq.s32.totalorder %s21, 0
      %p62 = por %p60, %p61
      %s63 = ssub.s32 %s22, %s34
      %s64 = ssub.s32 %s23, %s30
      %s65 = sor.u32 %s63, %s64
      %p66 = scmp.eq.s32.totalorder %s65, 0
      %s68 = sadd.s32 %s67, 1
      %s69 = scalar_select %p66, %s67, %s68
      %p72 = pneg %p66
      %p73 = scmp.eq.s32.totalorder %s15, 1
      %p74 = por %p72, %p73
      %p75 = scmp.ne.s32.totalorder %s67, %s70
      %p76 = scmp.eq.s32.totalorder %s15, 0
      %p77 = por %p75, %p76
      %p78 = scmp.ne.s32.totalorder %s67, %s70
      %p79 = scmp.eq.s32.totalorder %s20, 1
      %p80 = por %p78, %p79
      %p81 = scmp.ne.s32.totalorder %s70, %s71
      %p82 = scmp.eq.s32.totalorder %s20, 0
      %p83 = por %p81, %p82
      %p84 = scmp.ne.s32.totalorder %s70, %s71
      %p85 = scmp.eq.s32.totalorder %s21, 1
      %p86 = por %p84, %p85
      %p88 = scmp.ne.s32.totalorder %s71, %s87
      %p89 = scmp.eq.s32.totalorder %s21, 0
      %p90 = por %p88, %p89
      %s91 = ssub.s32 %s22, %s34
      %s92 = ssub.s32 %s23, %s30
      %s93 = sor.u32 %s91, %s92
      %p94 = scmp.eq.s32.totalorder %s93, 0
      %s96 = sadd.s32 %s95, 1
      %s97 = scalar_select %p94, %s95, %s96
      %p100 = pneg %p94
      %p101 = scmp.eq.s32.totalorder %s15, 1
      %p102 = por %p100, %p101
      %p103 = scmp.ne.s32.totalorder %s95, %s98
      %p104 = scmp.eq.s32.totalorder %s15, 0
      %p105 = por %p103, %p104
      %p106 = scmp.ne.s32.totalorder %s95, %s98
      %p107 = scmp.eq.s32.totalorder %s20, 1
      %p108 = por %p106, %p107
      %p109 = scmp.ne.s32.totalorder %s98, %s99
      %p110 = scmp.eq.s32.totalorder %s20, 0
      %p111 = por %p109, %p110
      %p112 = scmp.ne.s32.totalorder %s98, %s99
      %p113 = scmp.eq.s32.totalorder %s21, 1
      %p114 = por %p112, %p113
      %p116 = scmp.ne.s32.totalorder %s99, %s115
      %p117 = scmp.eq.s32.totalorder %s21, 0
      %p118 = por %p116, %p117
      %s119 = ssub.s32 %s22, %s34
      %p120 = scmp.eq.s32.totalorder %s119, 0
      %s122 = sadd.s32 %s121, 1
      %s123 = scalar_select %p120, %s121, %s122
      %p126 = pneg %p120
      %p127 = scmp.eq.s32.totalorder %s15, 1
      %p128 = por %p126, %p127
      %p129 = scmp.ne.s32.totalorder %s121, %s124
      %p130 = scmp.eq.s32.totalorder %s15, 0
      %p131 = por %p129, %p130
      %p132 = scmp.ne.s32.totalorder %s121, %s124
      %p133 = scmp.eq.s32.totalorder %s20, 1
      %p134 = por %p132, %p133
      %p135 = scmp.ne.s32.totalorder %s124, %s125
      %p136 = scmp.eq.s32.totalorder %s20, 0
      %p137 = por %p135, %p136
      %p138 = scmp.ne.s32.totalorder %s124, %s125
      %p139 = scmp.eq.s32.totalorder %s21, 1
      %p140 = por %p138, %p139
      %p142 = scmp.ne.s32.totalorder %s125, %s141
      %p143 = scmp.eq.s32.totalorder %s21, 0
      %p144 = por %p142, %p143
      %p145 = scmp.le.s32.totalorder 1, %s15
      %p146 = scmp.lt.s32.totalorder %s15, 3
      %p147 = pnand %p145, %p146
      %p148 = pneg %p147
      // Predicated region
      $region9: #{tpu_custom_call.1} parent=5 // pred_check
        _
      $region10: #{tpu_custom_call.1} parent=5 // pred_check_branch
        %150 = sbr.rel (%p147) target = $region12
      $region11: #{tpu_custom_call.1} parent=5 // pred_region
        %s151 = ssub.s32 %s15, 1
      $region12: #{tpu_custom_call.1} parent=5 // pred_fallthru
        _
      %p152 = scmp.lt.s32.totalorder %s15, 2
      // Predicated region
      $region13: #{tpu_custom_call.1} parent=5 // pred_check
        %p153 = pneg %p152
      $region14: #{tpu_custom_call.1} parent=5 // pred_check_branch
        %155 = sbr.rel (%p153) target = $region16
      $region15: #{tpu_custom_call.1} parent=5 // pred_region
        // Predicated region
        $region17: #{tpu_custom_call.1} parent=15 // pred_check
          %p156 = pneg %p49
        $region18: #{tpu_custom_call.1} parent=15 // pred_check_branch
          %158 = sbr.rel (%p156) target = $region20
        $region19: #{tpu_custom_call.1} parent=15 // pred_region
          %s159 = sand.u32 %s39, 1
          %s160 = scalar_lea.sflag [#allocation7], %s159
          %s161 = sand.u32 %s39, 1
          %s162 = smul.addr %s161, 8
          %s163 = scalar_lea.vmem [#allocation6], %s162
          %s165 = ssub.s32 128, 128
          %166 = vsyncadd %s160, %s165
          %s167 = sadd.s32 %s23, %s22
          %s168 = smul.addr %s167, 128
          %s169 = scalar_lea.hbm %s0, %s168
          %s171 = sshll.u32 %s163, 4
          %s172 = int_to_ptr.vmem [resolvable:$true] %s171
          %174 = dma.hbm_to_vmem [thread:$0]  %s169, 128, %s172, %s160
        $region20: #{tpu_custom_call.1} parent=15 // pred_fallthru
          _
        // Predicated region
        $region21: #{tpu_custom_call.1} parent=15 // pred_check
          %p175 = pneg %p77
        $region22: #{tpu_custom_call.1} parent=15 // pred_check_branch
          %177 = sbr.rel (%p175) target = $region24
        $region23: #{tpu_custom_call.1} parent=15 // pred_region
          %s178 = sand.u32 %s15, 1
          %s179 = scalar_lea.sflag [#allocation9], %s178
          %s180 = sand.u32 %s67, 1
          %s181 = smul.addr %s180, 8
          %s182 = scalar_lea.vmem [#allocation8], %s181
          %s184 = ssub.s32 128, 128
          %185 = vsyncadd %s179, %s184
          %s186 = sadd.s32 %s23, %s22
          %s187 = smul.addr %s186, 128
          %s188 = scalar_lea.hbm %s1, %s187
          %s190 = sshll.u32 %s182, 4
          %s191 = int_to_ptr.vmem [resolvable:$true] %s190
          %193 = dma.hbm_to_vmem [thread:$0]  %s188, 128, %s191, %s179
        $region24: #{tpu_custom_call.1} parent=15 // pred_fallthru
          _
        // Predicated region
        $region25: #{tpu_custom_call.1} parent=15 // pred_check
          %p194 = pneg %p105
        $region26: #{tpu_custom_call.1} parent=15 // pred_check_branch
          %196 = sbr.rel (%p194) target = $region28
        $region27: #{tpu_custom_call.1} parent=15 // pred_region
          %s197 = sand.u32 %s15, 1
          %s198 = scalar_lea.sflag [#allocation9], %s197
          %s199 = sand.u32 %s95, 1
          %s200 = smul.addr %s199, 8
          %s201 = scalar_lea.vmem [#allocation10], %s200
          %s203 = ssub.s32 128, 128
          %204 = vsyncadd %s198, %s203
          %s205 = sadd.s32 %s23, %s22
          %s206 = smul.addr %s205, 128
          %s207 = scalar_lea.hbm %s2, %s206
          %s209 = sshll.u32 %s201, 4
          %s210 = int_to_ptr.vmem [resolvable:$true] %s209
          %212 = dma.hbm_to_vmem [thread:$0]  %s207, 128, %s210, %s198
        $region28: #{tpu_custom_call.1} parent=15 // pred_fallthru
          _
      $region16: #{tpu_custom_call.1} parent=5 // pred_fallthru
        _
      %p213 = scmp.le.s32.totalorder 1, %s15
      %p214 = scmp.lt.s32.totalorder %s15, 3
      %p215 = pnand %p213, %p214
      %p216 = pneg %p215
      // Predicated region
      $region29: #{tpu_custom_call.1} parent=5 // pred_check
        _
      $region30: #{tpu_custom_call.1} parent=5 // pred_check_branch
        %218 = sbr.rel (%p215) target = $region32
      $region31: #{tpu_custom_call.1} parent=5 // pred_region
        %s219 = ssub.s32 %s15, 1
        %s220 = sand.u32 %s42, 1
        %s221 = scalar_lea.sflag [#allocation7], %s220
        %s222 = sand.u32 %s42, 1
        %s223 = smul.addr %s222, 8
        %s224 = scalar_lea.vmem [#allocation6], %s223
        // Predicated region
        $region33: #{tpu_custom_call.1} parent=31 // pred_check
          %p225 = pneg %p55
        $region34: #{tpu_custom_call.1} parent=31 // pred_check_branch
          %227 = sbr.rel (%p225) target = $region36
        $region35: #{tpu_custom_call.1} parent=31 // pred_region
          %228 = dma.done %s221, 128
        $region36: #{tpu_custom_call.1} parent=31 // pred_fallthru
          _
        %s229 = sand.u32 %s20, 1
        %s230 = scalar_lea.sflag [#allocation9], %s229
        %s231 = sand.u32 %s70, 1
        %s232 = smul.addr %s231, 8
        %s233 = scalar_lea.vmem [#allocation8], %s232
        // Predicated region
        $region37: #{tpu_custom_call.1} parent=31 // pred_check
          %p234 = pneg %p83
        $region38: #{tpu_custom_call.1} parent=31 // pred_check_branch
          %236 = sbr.rel (%p234) target = $region40
        $region39: #{tpu_custom_call.1} parent=31 // pred_region
          %237 = dma.done %s230, 128
        $region40: #{tpu_custom_call.1} parent=31 // pred_fallthru
          _
        %s238 = sand.u32 %s20, 1
        %s239 = scalar_lea.sflag [#allocation9], %s238
        %s240 = sand.u32 %s98, 1
        %s241 = smul.addr %s240, 8
        %s242 = scalar_lea.vmem [#allocation10], %s241
        // Predicated region
        $region41: #{tpu_custom_call.1} parent=31 // pred_check
          %p243 = pneg %p111
        $region42: #{tpu_custom_call.1} parent=31 // pred_check_branch
          %245 = sbr.rel (%p243) target = $region44
        $region43: #{tpu_custom_call.1} parent=31 // pred_region
          %246 = dma.done %s239, 128
        $region44: #{tpu_custom_call.1} parent=31 // pred_fallthru
          _
        %s247 = sand.u32 %s42, 1
        %s248 = scalar_lea.sflag [#allocation7], %s247
        %s249 = sand.u32 %s42, 1
        %s250 = smul.addr %s249, 8
        %s251 = scalar_lea.vmem [#allocation6], %s250
        %p252 = pneg %p55
        %p253 = pneg %p52
        %s254 = sand.u32 %s20, 1
        %s255 = scalar_lea.sflag [#allocation9], %s254
        %s256 = sand.u32 %s70, 1
        %s257 = smul.addr %s256, 8
        %s258 = scalar_lea.vmem [#allocation8], %s257
        %p259 = pneg %p83
        %p260 = pneg %p80
        %s261 = sand.u32 %s20, 1
        %s262 = scalar_lea.sflag [#allocation9], %s261
        %s263 = sand.u32 %s98, 1
        %s264 = smul.addr %s263, 8
        %s265 = scalar_lea.vmem [#allocation10], %s264
        %p266 = pneg %p111
        %p267 = pneg %p108
        %p268 = pneg %p137
        %p269 = pneg %p134
        %p270 = scmp.lt.s32.totalorder %s24, 1
        %s271 = scalar_select %p270, %s24, 1
        %s272 = smul.addr %s271, 8
        %s273 = scalar_lea.vmem %s3, %s272
        %p274 = scmp.lt.s32.totalorder %s24, 1
        %s275 = scalar_select %p274, %s24, 1
        %s276 = smul.addr %s275, 8
        %s277 = scalar_lea.vmem %s3, %s276
        %p278 = scmp.eq.s32.totalorder %s25, 0
        // Predicated region
        $region45: #{tpu_custom_call.1} parent=31 // pred_check
          %p279 = pneg %p278
        $region46: #{tpu_custom_call.1} parent=31 // pred_check_branch
          %281 = sbr.rel (%p279) target = $region48
        $region47: #{tpu_custom_call.1} parent=31 // pred_region
          %vm282 = vcmask 7168
          %283 = vst.msk [vmem:[#allocation2] sm:$0xff] %vm282, -inf
          %284 = vst.msk [vmem:[#allocation3] sm:$0xff] %vm282, 0.0
          %285 = vst.msk [vmem:[#allocation4] sm:$0xff] %vm282, 0.0
          %286 = vst.msk [vmem:[#allocation5] sm:$0xff] %vm282, 0.0
        $region48: #{tpu_custom_call.1} parent=31 // pred_fallthru
          _
        %v287 = vld [vmem:[%s224] sm:$0xff]
        %v288 = vld [vmem:[%s233] sm:$0xff]
        %v289 = vld [vmem:[%s242] sm:$0xff]
        %v290 = vsub.f32 1.0, %v289
        %v291 = vmul.f32 %v290, %v288
        %292 = vmax.xlane.f32.xlu0 %v287
        %v293 = vpop.xlane.xlu0 %292
        %v294 = vld [vmem:[#allocation2] sm:$0xff]
        %v295 = vmax.f32 %v294, %v293
        %v296 = vsub.f32 %v294, %v295
        %v297 = vmul.f32 %v296, 1.442695
        %v298 = vpow.pop %v297
        %300 = vset.pattern.permute.xlu0 0
        %301 = vperm.xlu0 %300, %v295
        %v302 = vpop.permute.xlu0 %301
        %v304 = vsub.f32 %v287, %v302
        %v305 = vmul.f32 %v304, 1.442695
        %v306 = vpow.pop %v305
        %v307 = vmul.f32 %v291, %v287
        %308 = vadd.xlane.f32.xlu0 %v306
        %v309 = vpop.xlane.xlu0 %308
        %310 = vadd.xlane.f32.xlu0 %v291
        %v311 = vpop.xlane.xlu0 %310
        %312 = vadd.xlane.f32.xlu0 %v307
        %v313 = vpop.xlane.xlu0 %312
        %v314 = vld [vmem:[#allocation3] sm:$0xff]
        %v315 = vmul.f32 %v298, %v314
        %v316 = vadd.f32 %v315, %v309
        %vm317 = vcmask 7168
        %318 = vst.msk [vmem:[#allocation3] sm:$0xff] %vm317, %v316
        %319 = vst.msk [vmem:[#allocation2] sm:$0xff] %vm317, %v295
        %v320 = vld [vmem:[#allocation4] sm:$0xff]
        %v321 = vadd.f32 %v320, %v311
        %322 = vst.msk [vmem:[#allocation4] sm:$0xff] %vm317, %v321
        %v323 = vld [vmem:[#allocation5] sm:$0xff]
        %v324 = vadd.f32 %v323, %v313
        %325 = vst.msk [vmem:[#allocation5] sm:$0xff] %vm317, %v324
        // Predicated region
        $region49: #{tpu_custom_call.1} parent=31 // pred_check
          %p326 = pneg %p278
        $region50: #{tpu_custom_call.1} parent=31 // pred_check_branch
          %328 = sbr.rel (%p326) target = $region52
        $region51: #{tpu_custom_call.1} parent=31 // pred_region
          %v329 = vld [vmem:[#allocation2] sm:$0xff]
          %v330 = vld [vmem:[#allocation3] sm:$0xff]
          %v331 = vlog2.pop %v330
          %v332 = vmul.f32 %v331, 0.6931472
          %v333 = vadd.f32 %v329, %v332
          %v334 = vld [vmem:[#allocation4] sm:$0xff]
          %v335 = vmul.f32 %v333, %v334
          %v336 = vld [vmem:[#allocation5] sm:$0xff]
          %v337 = vsub.f32 %v335, %v336
          %338 = vst.msk [vmem:[%s277] sm:$0xff] %vm317, %v337
        $region52: #{tpu_custom_call.1} parent=31 // pred_fallthru
          _
        %p339 = scmp.lt.s32.totalorder %s24, 1
        %s340 = scalar_select %p339, %s24, 1
        %s341 = smul.addr %s340, 8
        %s342 = scalar_lea.vmem %s3, %s341
        // Predicated region
        $region53: #{tpu_custom_call.1} parent=31 // pred_check
          %p343 = pneg %p134
        $region54: #{tpu_custom_call.1} parent=31 // pred_check_branch
          %345 = sbr.rel (%p343) target = $region56
        $region55: #{tpu_custom_call.1} parent=31 // pred_region
          _
        $region56: #{tpu_custom_call.1} parent=31 // pred_fallthru
          _
      $region32: #{tpu_custom_call.1} parent=5 // pred_fallthru
        _
      %p346 = scmp.le.s32.totalorder 2, %s15
      // Predicated region
      $region57: #{tpu_custom_call.1} parent=5 // pred_check
        %p347 = pneg %p346
      $region58: #{tpu_custom_call.1} parent=5 // pred_check_branch
        %349 = sbr.rel (%p347) target = $region60
      $region59: #{tpu_custom_call.1} parent=5 // pred_region
        %s350 = ssub.s32 %s15, 2
        // Predicated region
        $region61: #{tpu_custom_call.1} parent=59 // pred_check
          %p351 = pneg %p140
        $region62: #{tpu_custom_call.1} parent=59 // pred_check_branch
          %353 = sbr.rel (%p351) target = $region64
        $region63: #{tpu_custom_call.1} parent=59 // pred_region
          %p354 = scmp.lt.s32.totalorder %s26, 1
          %s355 = scalar_select %p354, %s26, 1
          %s356 = smul.addr %s355, 8
          %s357 = scalar_lea.vmem %s3, %s356
        $region64: #{tpu_custom_call.1} parent=59 // pred_fallthru
          _
      $region60: #{tpu_custom_call.1} parent=5 // pred_fallthru
        _
    $region6: #{tpu_custom_call.1} parent=1 // loop_footer
      %s19 = sadd.s32 1, %s15
    $region7: #{tpu_custom_call.1} parent=1 // loop_footer_branch
      %14 = sbr.rel target = $region3
    $region8: #{tpu_custom_call.1} parent=1 // loop_exit
      _
    %358 = vsyncpa [#allocation7], 1
    %s359 = scalar_lea.sflag [#allocation7], 1
    %360 = vsyncpa %s359, 1
    %361 = vsyncpa [#allocation9], 1
    %s362 = scalar_lea.sflag [#allocation9], 1
    %363 = vsyncpa %s362, 1

</llo_original>
